<compile_context>
chip_gen: v7x
topology: tpu7x:2x2x1
jax: 0.10.0
libtpu: 0.0.40
codegen_flags: <defaults>
</compile_context>

<pallas_src>
import jax
import jax.numpy as jnp
from jax.experimental import pallas as pl
from jax.experimental.pallas import tpu as pltpu

_LANE = 128
_MAX_BATCH_BLOCK = 32          # bound static unrolling in the kernel body


def outconv_kernel(x_ref, w_ref, b_ref, o_ref):
    """1x1 conv + bias on one (batch-block, spatial-tile) block.

    x_ref : (Bblk, Cin, T)   input tile (spatial on lanes), VMEM
    w_ref : (Cout, Cin)      resident weights, VMEM
    b_ref : (Cout, 1)        resident bias, VMEM
    o_ref : (Bblk, Cout, T)  output tile, VMEM
    """
    w = w_ref[...]
    bias = b_ref[...]
    for i in range(x_ref.shape[0]):            # small static batch block
        y = jnp.dot(w, x_ref[i], preferred_element_type=jnp.float32)
        o_ref[i] = (y + bias).astype(o_ref.dtype)


def _round_up(x, m):
    return ((x + m - 1) // m) * m


def _largest_divisor_leq(n, cap):
    cap = max(1, min(n, int(cap)))
    for d in range(cap, 0, -1):
        if n % d == 0:
            return d
    return 1


def _vmem_capacity_bytes():
    """Physical per-TC VMEM; conservative (v7x) fallback if query unavailable."""
    try:
        info_fn = getattr(pltpu, "get_tpu_info", None)
        if info_fn is not None:
            cap = getattr(info_fn(), "vmem_capacity_bytes", None)
            if cap:
                return int(cap)
    except Exception:
        pass
    return 64 * 1024 * 1024


def out_conv(x_nchw, w, b):
    """Forward pass equivalent to OutConv(in_ch, out_ch).forward(x).

    x_nchw : (N, Cin, H, W)
    w      : (Cout, Cin)   1x1 conv weights (PyTorch weight squeezed)
    b      : (Cout,)       bias
    """
    N, Cin, H, W = x_nchw.shape
    Cout = w.shape[0]
    HW = H * W
    itemsize = jnp.dtype(x_nchw.dtype).itemsize

    # VMEM budgeting: ~48 MiB scoped limit on v7x (64 MiB physical/TC),
    # ~96 MiB on v5e/v6e (128 MiB physical).
    capacity = _vmem_capacity_bytes()
    vmem_limit = int(min(capacity * 3 // 4, 96 * 1024 * 1024))
    buffer_budget = max(vmem_limit - 8 * 1024 * 1024, 8 * 1024 * 1024)

    # Spatial tile: as large as the double-buffered (x + out) budget allows,
    # in 128-lane granules, capped at the 128-padded spatial extent.
    bytes_per_lane = 2 * (Cin + Cout) * itemsize       # double-buffered x + out
    t_budget = max(_LANE, (buffer_budget // bytes_per_lane) // _LANE * _LANE)
    T = min(_round_up(HW, _LANE), t_budget)

    HW_pad = _round_up(HW, T)
    s_tiles = HW_pad // T

    # Batch block: fold batch items per grid step when the spatial tile is
    # small, so per-step HBM traffic stays in the multi-MB range.
    per_item_bytes = (Cin + Cout) * T * itemsize
    target_bytes = 8 * 1024 * 1024
    bblk_vmem = max(1, buffer_budget // (2 * per_item_bytes))
    bblk_target = max(1, -(-target_bytes // per_item_bytes))
    Bblk = _largest_divisor_leq(N, min(bblk_vmem, bblk_target, _MAX_BATCH_BLOCK))
    b_tiles = N // Bblk

    x2 = x_nchw.reshape(N, Cin, HW)                    # contiguous, no transpose
    if HW_pad != HW:
        x2 = jnp.pad(x2, ((0, 0), (0, 0), (0, HW_pad - HW)))

    # Put the larger parallel axis first (v7x 2-TC sharding; no-op elsewhere).
    spatial_first = s_tiles >= b_tiles
    if spatial_first:
        grid = (s_tiles, b_tiles)
        xo_map = lambda s, bb: (bb, 0, s)
        c_map = lambda s, bb: (0, 0)
    else:
        grid = (b_tiles, s_tiles)
        xo_map = lambda bb, s: (bb, 0, s)
        c_map = lambda bb, s: (0, 0)

    cost = pl.CostEstimate(
        flops=2 * N * Cout * Cin * HW_pad,
        transcendentals=0,
        bytes_accessed=(N * (Cin + Cout) * HW_pad + Cout * Cin + Cout) * itemsize,
    )

    out = pl.pallas_call(
        outconv_kernel,
        out_shape=jax.ShapeDtypeStruct((N, Cout, HW_pad), x_nchw.dtype),
        grid=grid,
        in_specs=[
            pl.BlockSpec((Bblk, Cin, T), xo_map),      # x tile
            pl.BlockSpec((Cout, Cin), c_map),          # resident weights
            pl.BlockSpec((Cout, 1), c_map),            # resident bias
        ],
        out_specs=pl.BlockSpec((Bblk, Cout, T), xo_map),
        compiler_params=pltpu.CompilerParams(
            dimension_semantics=("parallel", "parallel"),
            vmem_limit_bytes=vmem_limit,
        ),
        cost_estimate=cost,
    )(x2, w, b.reshape(Cout, 1))

    return out[:, :, :HW].reshape(N, Cout, H, W)


def init_params(key, in_channels, out_channels):
    kw, kb = jax.random.split(key)
    bound = (1.0 / in_channels) ** 0.5      # Conv2d default init, kernel_size=1
    w = jax.random.uniform(kw, (out_channels, in_channels), jnp.float32,
                           -bound, bound)
    b = jax.random.uniform(kb, (out_channels,), jnp.float32, -bound, bound)
    return w, b


def _reference(x_nchw, w, b):
    """Pure-JAX reference (1x1 conv + bias)."""
    y = jnp.einsum("nchw,oc->nohw", x_nchw, w)
    return y + b[None, :, None, None]


if __name__ == "__main__":
    key = jax.random.PRNGKey(0)
    kx, kp, kx2, kp2 = jax.random.split(key, 4)

    # Main check: batch=2, Cin=4 -> Cout=8, 16x16 image (NCHW, like PyTorch).
    in_channels, out_channels = 4, 8
    x = jax.random.normal(kx, (2, in_channels, 16, 16), jnp.float32)
    w, b = init_params(kp, in_channels, out_channels)

    out = jax.block_until_ready(out_conv(x, w, b))
    ref = jax.block_until_ready(_reference(x, w, b))
    assert out.shape == (2, out_channels, 16, 16), out.shape
    assert jnp.allclose(out, ref, atol=1e-4, rtol=1e-4), \
        float(jnp.max(jnp.abs(out - ref)))

    # Second check: H*W not a multiple of 128 exercises the padding path.
    in2, out2 = 4, 6
    x_odd = jax.random.normal(kx2, (2, in2, 10, 10), jnp.float32)
    w2, b2 = init_params(kp2, in2, out2)
    y_odd = jax.block_until_ready(out_conv(x_odd, w2, b2))
    ref_odd = jax.block_until_ready(_reference(x_odd, w2, b2))
    assert y_odd.shape == (2, out2, 10, 10), y_odd.shape
    assert jnp.allclose(y_odd, ref_odd, atol=1e-4, rtol=1e-4), \
        float(jnp.max(jnp.abs(y_odd - ref_odd)))

    print("KERNEL_OK")
</pallas_src>

<mosaic_0001>
module attributes {stable_mosaic.version = 11 : i64} {
  func.func @outconv_kernel(%arg0: i32, %arg1: i32, %arg2: memref<2x4x256xf32, #tpu.memory_space<vmem>>, %arg3: memref<8x4xf32, #tpu.memory_space<vmem>>, %arg4: memref<8x1xf32, #tpu.memory_space<vmem>>, %arg5: memref<2x8x256xf32, #tpu.memory_space<vmem>>) attributes {dimension_semantics = [#tpu.dimension_semantics<parallel>, #tpu.dimension_semantics<parallel>], iteration_bounds = array<i64: 1, 1>, scalar_prefetch = 0 : i64, scratch_operands = 0 : i64, tpu.core_type = #tpu.core_type<tc>, window_params = [{transform_indices = @transform_0, window_bounds = array<i64: 2, 4, 256>}, {pipeline_mode = #tpu.pipeline_mode<synchronous>, transform_indices = @transform_1, window_bounds = array<i64: 8, 4>}, {pipeline_mode = #tpu.pipeline_mode<synchronous>, transform_indices = @transform_2, window_bounds = array<i64: 8, 1>}, {transform_indices = @transform_3, window_bounds = array<i64: 2, 8, 256>}]} {
    %c0 = arith.constant 0 : index
    %c0_0 = arith.constant 0 : index
    %0 = vector.load %arg3[%c0, %c0_0] : memref<8x4xf32, #tpu.memory_space<vmem>>, vector<8x4xf32>
    %c0_1 = arith.constant 0 : index
    %c0_2 = arith.constant 0 : index
    %1 = vector.load %arg4[%c0_1, %c0_2] : memref<8x1xf32, #tpu.memory_space<vmem>>, vector<8x1xf32>
    %c0_3 = arith.constant 0 : index
    %c0_4 = arith.constant 0 : index
    %c0_5 = arith.constant 0 : index
    %2 = vector.load %arg2[%c0_3, %c0_4, %c0_5] : memref<2x4x256xf32, #tpu.memory_space<vmem>>, vector<1x4x256xf32>
    %3 = vector.shape_cast %2 : vector<1x4x256xf32> to vector<4x256xf32>
    %cst = arith.constant dense<0.000000e+00> : vector<8x256xf32>
    %4 = tpu.matmul %0, %3, %cst {dimension_numbers = #tpu.dot_dimension_numbers<[1], [0], [0], [1], [0, 0, 1, 1], [], []>} : vector<8x4xf32>, vector<4x256xf32>, vector<8x256xf32> -> vector<8x256xf32>
    %5 = vector.broadcast %1 : vector<8x1xf32> to vector<8x256xf32>
    %6 = arith.addf %4, %5 : vector<8x256xf32>
    %c0_6 = arith.constant 0 : index
    %c0_7 = arith.constant 0 : index
    %c0_8 = arith.constant 0 : index
    %7 = vector.load %arg5[%c0_6, %c0_7, %c0_8] : memref<2x8x256xf32, #tpu.memory_space<vmem>>, vector<1x8x256xf32>
    %8 = vector.shape_cast %7 : vector<1x8x256xf32> to vector<8x256xf32>
    %9 = vector.shape_cast %6 : vector<8x256xf32> to vector<1x8x256xf32>
    tpu.vector_store %arg5[%c0_6, %c0_7, %c0_8], %9 {strides = array<i32>} : memref<2x8x256xf32, #tpu.memory_space<vmem>>, vector<1x8x256xf32>,
    %c1 = arith.constant 1 : index
    %c0_9 = arith.constant 0 : index
    %c0_10 = arith.constant 0 : index
    %10 = vector.load %arg2[%c1, %c0_9, %c0_10] : memref<2x4x256xf32, #tpu.memory_space<vmem>>, vector<1x4x256xf32>
    %11 = vector.shape_cast %10 : vector<1x4x256xf32> to vector<4x256xf32>
    %cst_11 = arith.constant dense<0.000000e+00> : vector<8x256xf32>
    %12 = tpu.matmul %0, %11, %cst_11 {dimension_numbers = #tpu.dot_dimension_numbers<[1], [0], [0], [1], [0, 0, 1, 1], [], []>} : vector<8x4xf32>, vector<4x256xf32>, vector<8x256xf32> -> vector<8x256xf32>
    %13 = vector.broadcast %1 : vector<8x1xf32> to vector<8x256xf32>
    %14 = arith.addf %12, %13 : vector<8x256xf32>
    %c1_12 = arith.constant 1 : index
    %c0_13 = arith.constant 0 : index
    %c0_14 = arith.constant 0 : index
    %15 = vector.load %arg5[%c1_12, %c0_13, %c0_14] : memref<2x8x256xf32, #tpu.memory_space<vmem>>, vector<1x8x256xf32>
    %16 = vector.shape_cast %15 : vector<1x8x256xf32> to vector<8x256xf32>
    %17 = vector.shape_cast %14 : vector<8x256xf32> to vector<1x8x256xf32>
    tpu.vector_store %arg5[%c1_12, %c0_13, %c0_14], %17 {strides = array<i32>} : memref<2x8x256xf32, #tpu.memory_space<vmem>>, vector<1x8x256xf32>,
    return
  }
  func.func @transform_0(%arg0: i32, %arg1: i32) -> (i32, i32, i32) {
    %c0_i32 = arith.constant 0 : i32
    %c0_i32_0 = arith.constant 0 : i32
    return %arg1, %c0_i32, %arg0 : i32, i32, i32
  }
  func.func @transform_1(%arg0: i32, %arg1: i32) -> (i32, i32) {
    %c0_i32 = arith.constant 0 : i32
    %c0_i32_0 = arith.constant 0 : i32
    %c0_i32_1 = arith.constant 0 : i32
    return %c0_i32, %c0_i32_0 : i32, i32
  }
  func.func @transform_2(%arg0: i32, %arg1: i32) -> (i32, i32) {
    %c0_i32 = arith.constant 0 : i32
    %c0_i32_0 = arith.constant 0 : i32
    %c0_i32_1 = arith.constant 0 : i32
    return %c0_i32, %c0_i32_0 : i32, i32
  }
  func.func @transform_3(%arg0: i32, %arg1: i32) -> (i32, i32, i32) {
    %c0_i32 = arith.constant 0 : i32
    %c0_i32_0 = arith.constant 0 : i32
    return %arg1, %c0_i32, %arg0 : i32, i32, i32
  }
}

</mosaic_0001>

<llo_original>
// kernel: tpu_custom_call.1
$region0: #{tpu_custom_call.1}
  #allocation0 [shape = 'u32[]', space=smem, size = 0x4, offset = 0x4, fixed_abs, tag = 'smem constant byte address 0x4 - core index']
  #allocation1 [shape = 'u32[144,128]{1,0:T(1,128)}', space=vmem, size = 0x12000, scoped, tag = 'internal scratch']
  %s0 = inlined_call_operand.vmem [shape: f32[2,4,256], index: 0, kind: input, shape index: {}]
  %s1 = inlined_call_operand.vmem [shape: f32[8,4], index: 1, kind: input, shape index: {}]
  %s2 = inlined_call_operand.vmem [shape: f32[8,1], index: 2, kind: input, shape index: {}]
  %s3 = inlined_call_operand.hbm [shape: f32[2,8,256], index: 3, kind: output, shape index: {}]
  %s4 = sld [smem:[#allocation0]]
  $region22: #{tpu_custom_call.1} parent=0
    _
  %s6 = ssub.s32 1, %s4
  %s7 = scalar_select 0, %s6, %s4
  $region1: #{tpu_custom_call.1} parent=0
    #allocation2 [shape = 'u8[16384]{0}', space=vmem, size = 0x4000, scoped, tag = 'output window, operand 0, single buffered']
    #allocation3 [shape = 's32[1]{0}', space=sflag, size = 0x4, scoped, tag = 'scoped memory for tpu_custom_call.1']
    %8 = vsyncpa [#allocation3], 0
    // Predicated region
    $region2: #{tpu_custom_call.1} parent=1 // pred_check
      _
    $region3: #{tpu_custom_call.1} parent=1 // pred_check_branch
      %10 = sbr.rel (0) target = $region5
    $region4: #{tpu_custom_call.1} parent=1 // pred_region
      _
    $region5: #{tpu_custom_call.1} parent=1 // pred_fallthru
      _
    // Predicated region
    $region6: #{tpu_custom_call.1} parent=1 // pred_check
      _
    $region7: #{tpu_custom_call.1} parent=1 // pred_check_branch
      %12 = sbr.rel (0) target = $region9
    $region8: #{tpu_custom_call.1} parent=1 // pred_region
      _
    $region9: #{tpu_custom_call.1} parent=1 // pred_fallthru
      _
    // Predicated region
    $region10: #{tpu_custom_call.1} parent=1 // pred_check
      _
    $region11: #{tpu_custom_call.1} parent=1 // pred_check_branch
      %14 = sbr.rel (0) target = $region13
    $region12: #{tpu_custom_call.1} parent=1 // pred_region
      _
    $region13: #{tpu_custom_call.1} parent=1 // pred_fallthru
      _
    %v15 = vld [vmem:[%s1] sm:$0xff]
    %v16 = vld [vmem:[%s2] sm:$0xff]
    %v17 = vld [vmem:[%s0] sm:$0xff]
    %19 = vset.pattern.permute.xlu0 0
    %20 = vperm.xlu0 %19, %v16
    %v21 = vpop.permute.xlu0 %20
    %v24 = vcombine.high %v17, %v17
    %vm25 = vcmask 31744
    %v27 = vsel %vm25, %v15, 0
    %vm29 = vcmask 1043456
    %v30 = vsel %vm29, %v17, 0
    %v32 = vsel %vm29, %v24, 0
    %34 = vmatprep.subr.mxu0 %v32
    %35 = vmatpush1.msra.mxu0 %v30
    %36 = vmatprep.subr.mxu0 0.0
    %37 = vmatpush1.msra.mxu0 0.0
    %38 = vmatprep.subr.mxu0 0.0
    %39 = vmatpush1.msra.mxu0 0.0
    %40 = vmatprep.subr.mxu0 0.0
    %41 = vmatpush1.msra.mxu0 0.0
    %42 = vmatprep.subr.mxu0 0.0
    %43 = vmatpush1.msra.mxu0 0.0
    %44 = vmatprep.subr.mxu0 0.0
    %45 = vmatpush1.msra.mxu0 0.0
    %46 = vmatprep.subr.mxu0 0.0
    %47 = vmatpush1.msra.mxu0 0.0
    %48 = vmatprep.subr.mxu0 0.0
    %49 = vmatpush1.msra.mxu0 0.0
    %50 = vmatprep.subr.mxu0 0.0
    %51 = vmatpush1.msra.mxu0 0.0
    %52 = vmatprep.subr.mxu0 0.0
    %53 = vmatpush1.msra.mxu0 0.0
    %54 = vmatprep.subr.mxu0 0.0
    %55 = vmatpush1.msra.mxu0 0.0
    %56 = vmatprep.subr.mxu0 0.0
    %57 = vmatpush1.msra.mxu0 0.0
    %58 = vmatprep.subr.mxu0 0.0
    %59 = vmatpush1.msra.mxu0 0.0
    %60 = vmatprep.subr.mxu0 0.0
    %61 = vmatpush1.msra.mxu0 0.0
    %62 = vmatprep.subr.mxu0 0.0
    %63 = vmatpush1.msra.mxu0 0.0
    %64 = vmatprep.subr.mxu0 0.0
    %65 = vmatpush1.msra.mxu0 0.0
    %66 = vmatprep.subr.mxu0 0.0
    %67 = vmatpush1.msra.mxu0 0.0
    %68 = vmatprep.subr.mxu0 0.0
    %69 = vmatpush1.msra.mxu0 0.0
    %70 = vmatprep.subr.mxu0 0.0
    %71 = vmatpush1.msra.mxu0 0.0
    %72 = vmatprep.subr.mxu0 0.0
    %73 = vmatpush1.msra.mxu0 0.0
    %74 = vmatprep.subr.mxu0 0.0
    %75 = vmatpush1.msra.mxu0 0.0
    %76 = vmatprep.subr.mxu0 0.0
    %77 = vmatpush1.msra.mxu0 0.0
    %78 = vmatprep.subr.mxu0 0.0
    %79 = vmatpush1.msra.mxu0 0.0
    %80 = vmatprep.subr.mxu0 0.0
    %81 = vmatpush1.msra.mxu0 0.0
    %82 = vmatprep.subr.mxu0 0.0
    %83 = vmatpush1.msra.mxu0 0.0
    %84 = vmatprep.subr.mxu0 0.0
    %85 = vmatpush1.msra.mxu0 0.0
    %86 = vmatprep.subr.mxu0 0.0
    %87 = vmatpush1.msra.mxu0 0.0
    %88 = vmatprep.subr.mxu0 0.0
    %89 = vmatpush1.msra.mxu0 0.0
    %90 = vmatprep.subr.mxu0 0.0
    %91 = vmatpush1.msra.mxu0 0.0
    %92 = vmatprep.subr.mxu0 0.0
    %93 = vmatpush1.msra.mxu0 0.0
    %94 = vmatprep.subr.mxu0 0.0
    %95 = vmatpush1.msra.mxu0 0.0
    %96 = vmatprep.subr.mxu0 0.0
    %97 = vmatpush1.msra.mxu0 0.0
    %98 = vmatprep.mubr.f32.mxu0 0.0
    %99 = vmatmul.mubr.f32.gmra.mrb[0].mxu0 %v27
    %v100 = vpop.f32.mrb[0].mxu0
    %v101 = vadd.f32 %v21, %v100
    %v102 = vpop.f32.mrb[0].mxu0
    %v103 = vadd.f32 %v21, %v102
    %104 = vdwg.mxu0
    %105 = vst [vmem:[#allocation2] sm:$0xff] %v101
    %106 = vst [vmem:[#allocation2 + $0x8] sm:$0xff] %v103
    %s107 = scalar_lea.vmem %s0, 8
    %v108 = vld [vmem:[%s107] sm:$0xff]
    %v110 = vcombine.high %v108, %v108
    %v111 = vsel %vm29, %v108, 0
    %v113 = vsel %vm29, %v110, 0
    %115 = vmatprep.subr.mxu0 %v113
    %116 = vmatpush1.msra.mxu0 %v111
    %117 = vmatprep.subr.mxu0 0.0
    %118 = vmatpush1.msra.mxu0 0.0
    %119 = vmatprep.subr.mxu0 0.0
    %120 = vmatpush1.msra.mxu0 0.0
    %121 = vmatprep.subr.mxu0 0.0
    %122 = vmatpush1.msra.mxu0 0.0
    %123 = vmatprep.subr.mxu0 0.0
    %124 = vmatpush1.msra.mxu0 0.0
    %125 = vmatprep.subr.mxu0 0.0
    %126 = vmatpush1.msra.mxu0 0.0
    %127 = vmatprep.subr.mxu0 0.0
    %128 = vmatpush1.msra.mxu0 0.0
    %129 = vmatprep.subr.mxu0 0.0
    %130 = vmatpush1.msra.mxu0 0.0
    %131 = vmatprep.subr.mxu0 0.0
    %132 = vmatpush1.msra.mxu0 0.0
    %133 = vmatprep.subr.mxu0 0.0
    %134 = vmatpush1.msra.mxu0 0.0
    %135 = vmatprep.subr.mxu0 0.0
    %136 = vmatpush1.msra.mxu0 0.0
    %137 = vmatprep.subr.mxu0 0.0
    %138 = vmatpush1.msra.mxu0 0.0
    %139 = vmatprep.subr.mxu0 0.0
    %140 = vmatpush1.msra.mxu0 0.0
    %141 = vmatprep.subr.mxu0 0.0
    %142 = vmatpush1.msra.mxu0 0.0
    %143 = vmatprep.subr.mxu0 0.0
    %144 = vmatpush1.msra.mxu0 0.0
    %145 = vmatprep.subr.mxu0 0.0
    %146 = vmatpush1.msra.mxu0 0.0
    %147 = vmatprep.subr.mxu0 0.0
    %148 = vmatpush1.msra.mxu0 0.0
    %149 = vmatprep.subr.mxu0 0.0
    %150 = vmatpush1.msra.mxu0 0.0
    %151 = vmatprep.subr.mxu0 0.0
    %152 = vmatpush1.msra.mxu0 0.0
    %153 = vmatprep.subr.mxu0 0.0
    %154 = vmatpush1.msra.mxu0 0.0
    %155 = vmatprep.subr.mxu0 0.0
    %156 = vmatpush1.msra.mxu0 0.0
    %157 = vmatprep.subr.mxu0 0.0
    %158 = vmatpush1.msra.mxu0 0.0
    %159 = vmatprep.subr.mxu0 0.0
    %160 = vmatpush1.msra.mxu0 0.0
    %161 = vmatprep.subr.mxu0 0.0
    %162 = vmatpush1.msra.mxu0 0.0
    %163 = vmatprep.subr.mxu0 0.0
    %164 = vmatpush1.msra.mxu0 0.0
    %165 = vmatprep.subr.mxu0 0.0
    %166 = vmatpush1.msra.mxu0 0.0
    %167 = vmatprep.subr.mxu0 0.0
    %168 = vmatpush1.msra.mxu0 0.0
    %169 = vmatprep.subr.mxu0 0.0
    %170 = vmatpush1.msra.mxu0 0.0
    %171 = vmatprep.subr.mxu0 0.0
    %172 = vmatpush1.msra.mxu0 0.0
    %173 = vmatprep.subr.mxu0 0.0
    %174 = vmatpush1.msra.mxu0 0.0
    %175 = vmatprep.subr.mxu0 0.0
    %176 = vmatpush1.msra.mxu0 0.0
    %177 = vmatprep.subr.mxu0 0.0
    %178 = vmatpush1.msra.mxu0 0.0
    %179 = vmatprep.mubr.f32.mxu0 0.0
    %180 = vmatmul.mubr.f32.gmra.mrb[0].mxu0 %v27
    %v181 = vpop.f32.mrb[0].mxu0
    %v182 = vadd.f32 %v21, %v181
    %v183 = vpop.f32.mrb[0].mxu0
    %v184 = vadd.f32 %v21, %v183
    %185 = vdwg.mxu0
    %s186 = scalar_lea.vmem [#allocation2], 16
    %187 = vst [vmem:[%s186] sm:$0xff] %v182
    %188 = vst [vmem:[%s186 + $0x8] sm:$0xff] %v184
    // Predicated region
    $region14: #{tpu_custom_call.1} parent=1 // pred_check
      _
    $region15: #{tpu_custom_call.1} parent=1 // pred_check_branch
      %190 = sbr.rel (0) target = $region17
    $region16: #{tpu_custom_call.1} parent=1 // pred_region
      %s192 = ssub.s32 512, 512
      %193 = vsyncadd [#allocation3], %s192
      %s194 = sshll.u32 [#allocation2], 4
      %s195 = int_to_ptr.vmem [resolvable:$true] %s194
      %200 = dma.vmem_to_hbm [thread:$0]  %s195, 512, %s3, [#allocation3], 256, 256, 16
    $region17: #{tpu_custom_call.1} parent=1 // pred_fallthru
      _
    // Predicated region
    $region18: #{tpu_custom_call.1} parent=1 // pred_check
      _
    $region19: #{tpu_custom_call.1} parent=1 // pred_check_branch
      %202 = sbr.rel (0) target = $region21
    $region20: #{tpu_custom_call.1} parent=1 // pred_region
      %203 = dma.done [#allocation3], 512
    $region21: #{tpu_custom_call.1} parent=1 // pred_fallthru
      _
    %204 = vsyncpa [#allocation3], 1

</llo_original>
